<compile_context>
chip_gen: v6e
topology: v6e:2x2x1
jax: 0.10.0
libtpu: 0.0.40
codegen_flags: <defaults>
</compile_context>

<pallas_src>
import functools

import jax
import jax.numpy as jnp
from jax import lax
from jax.experimental import pallas as pl
from jax.experimental.pallas import tpu as pltpu


def _round_up(x, m):
    return (x + m - 1) // m * m


def _deconv_prelu_kernel(cols_ref, w_ref, b_ref, alpha_ref, o_ref):
    # cols_ref : (1, 4*Cin, TM)  bf16  -> window axis on lanes (dense loads)
    # w_ref    : (4*Cout, 4*Cin) bf16  -> resident across the whole grid
    # b_ref    : (4*Cout, 1)     f32
    # alpha_ref: (1,)            f32   -> SMEM scalar (PReLU slope)
    # o_ref    : (1, 4*Cout, TM) f32   -> lane-dense, channels-first
    acc = jnp.dot(w_ref[...], cols_ref[0],
                  preferred_element_type=jnp.float32)        # (4*Cout, TM) f32
    y = acc + b_ref[...]                                     # broadcast bias
    a = alpha_ref[0]
    o_ref[0] = jnp.where(y >= 0.0, y, a * y).astype(o_ref.dtype)


@functools.partial(jax.jit, static_argnames=("kernel_size", "stride", "padding"))
def deconv_block_forward(x_nchw, weight, bias, prelu_alpha,
                         kernel_size=4, stride=2, padding=1):
    """PReLU(ConvTranspose2d(x)).  weight: (Cin, Cout, K, K) as in PyTorch."""
    K, s, P = kernel_size, stride, padding
    assert (K, s, P) == (4, 2, 1), "phase decomposition specialised to k=4,s=2,p=1"
    N, Cin, H, W = x_nchw.shape
    Cout = weight.shape[1]
    KC, C4 = 4 * Cin, 4 * Cout
    M = (H + 1) * (W + 1)                      # shared 2x2 window positions

    # Lane tile over the flattened window axis (multiple of 128, capped for VMEM).
    TM = min(1024, _round_up(M, 128))
    M_pad = _round_up(M, TM)

    # ---- glue (cheap XLA): 2x2 windows over the *original* (un-dilated) input.
    # cols[n, (a*2+b)*Cin+ci, wq*(W+1)+wr] = x_pad[n, ci, wq+a, wr+b], in bf16.
    x_pad = jnp.pad(x_nchw.astype(jnp.bfloat16),
                    ((0, 0), (0, 0), (1, 1), (1, 1)))
    slabs = [x_pad[:, :, a:a + H + 1, b:b + W + 1]
             for a in (0, 1) for b in (0, 1)]
    cols = jnp.concatenate(slabs, axis=1)                  # (N, 4*Cin, H+1, W+1)
    cols = cols.reshape(N, KC, M)
    cols = jnp.pad(cols, ((0, 0), (0, 0), (0, M_pad - M)))

    # Weight repack: Wt[(py*2+px)*Cout+co, (a*2+b)*Cin+ci] = W[ci,co,3-py-2a,3-px-2b]
    wf = weight[:, :, ::-1, ::-1].reshape(Cin, Cout, 2, 2, 2, 2)  # ci,co,a,py,b,px
    wt = jnp.transpose(wf, (3, 5, 1, 2, 4, 0)).reshape(C4, KC).astype(jnp.bfloat16)

    bias_f = jnp.tile(bias.astype(jnp.float32), 4).reshape(C4, 1)
    alpha = prelu_alpha.reshape(1).astype(jnp.float32)

    # ---- Pallas hot path: matmul + bias + PReLU, tiled over (batch, windows).
    out = pl.pallas_call(
        _deconv_prelu_kernel,
        out_shape=jax.ShapeDtypeStruct((N, C4, M_pad), jnp.float32),
        grid=(N, M_pad // TM),
        in_specs=[
            pl.BlockSpec((1, KC, TM), lambda n, m: (n, 0, m)),
            pl.BlockSpec((C4, KC), lambda n, m: (0, 0)),      # resident weight
            pl.BlockSpec((C4, 1), lambda n, m: (0, 0)),       # resident bias
            pl.BlockSpec(memory_space=pltpu.MemorySpace.SMEM),
        ],
        out_specs=pl.BlockSpec((1, C4, TM), lambda n, m: (n, 0, m)),
        compiler_params=pltpu.CompilerParams(
            dimension_semantics=("parallel", "parallel"),
            vmem_limit_bytes=32 * 1024 * 1024),
    )(cols, wt, bias_f, alpha)

    # ---- pixel-shuffle assembly: y[n,co,2q+py,2r+px] = Z[n,py,px,co,q+py,r+px]
    z = out[:, :, :M].reshape(N, 2, 2, Cout, H + 1, W + 1)
    y00 = z[:, 0, 0, :, :H, :W]
    y01 = z[:, 0, 1, :, :H, 1:]
    y10 = z[:, 1, 0, :, 1:, :W]
    y11 = z[:, 1, 1, :, 1:, 1:]
    even = jnp.stack([y00, y01], axis=-1).reshape(N, Cout, H, 2 * W)
    odd = jnp.stack([y10, y11], axis=-1).reshape(N, Cout, H, 2 * W)
    return jnp.stack([even, odd], axis=3).reshape(N, Cout, 2 * H, 2 * W)


def _reference(x_nchw, weight, bias, prelu_alpha, K=4, s=2, P=1):
    # pure-XLA reference for the same math (ConvTranspose2d + PReLU)
    w_oihw = jnp.transpose(jnp.flip(weight, axis=(2, 3)), (1, 0, 2, 3))
    pad = K - 1 - P
    y = lax.conv_general_dilated(
        x_nchw.astype(jnp.float32), w_oihw.astype(jnp.float32),
        window_strides=(1, 1), padding=[(pad, pad), (pad, pad)],
        lhs_dilation=(s, s), dimension_numbers=('NCHW', 'OIHW', 'NCHW'),
        precision=lax.Precision.HIGHEST)
    y = y + bias.reshape(1, -1, 1, 1)
    a = prelu_alpha.reshape(())
    return jnp.where(y >= 0, y, a * y)


if __name__ == "__main__":
    N, Cin, H, W = 2, 4, 16, 16
    Cout, K = 8, 4

    key = jax.random.PRNGKey(0)
    kx, kw, kb = jax.random.split(key, 3)

    x = jax.random.normal(kx, (N, Cin, H, W), dtype=jnp.float32)
    bound = 1.0 / jnp.sqrt(jnp.float32(Cin * K * K))
    weight = jax.random.uniform(kw, (Cin, Cout, K, K), jnp.float32,
                                minval=-bound, maxval=bound)
    bias = jax.random.uniform(kb, (Cout,), jnp.float32,
                              minval=-bound, maxval=bound)
    prelu_alpha = jnp.array([0.25], dtype=jnp.float32)  # PyTorch PReLU default

    out = deconv_block_forward(x, weight, bias, prelu_alpha)
    out = jax.block_until_ready(out)

    ref = _reference(x, weight, bias, prelu_alpha)
    assert out.shape == (N, Cout, 2 * H, 2 * W), out.shape
    if not jnp.allclose(out, ref, rtol=2e-2, atol=2e-2):
        raise AssertionError(
            f"mismatch: max abs err {float(jnp.max(jnp.abs(out - ref)))}")
    print("KERNEL_OK")
</pallas_src>

<mosaic_0001>
module attributes {stable_mosaic.version = 11 : i64} {
  func.func @_deconv_prelu_kernel(%arg0: i32, %arg1: i32, %arg2: memref<1x16x384xbf16, #tpu.memory_space<vmem>>, %arg3: memref<32x16xbf16, #tpu.memory_space<vmem>>, %arg4: memref<32x1xf32, #tpu.memory_space<vmem>>, %arg5: memref<1xf32, #tpu.memory_space<smem>>, %arg6: memref<1x32x384xf32, #tpu.memory_space<vmem>>) attributes {dimension_semantics = [#tpu.dimension_semantics<parallel>, #tpu.dimension_semantics<parallel>], iteration_bounds = array<i64: 2, 1>, scalar_prefetch = 0 : i64, scratch_operands = 0 : i64, tpu.core_type = #tpu.core_type<tc>, window_params = [{transform_indices = @transform_0, window_bounds = array<i64: 1, 16, 384>}, {pipeline_mode = #tpu.pipeline_mode<synchronous>, transform_indices = @transform_1, window_bounds = array<i64: 32, 16>}, {pipeline_mode = #tpu.pipeline_mode<synchronous>, transform_indices = @transform_2, window_bounds = array<i64: 32, 1>}, {transform_indices = @transform_3, window_bounds = array<i64: 1>}, {transform_indices = @transform_4, window_bounds = array<i64: 1, 32, 384>}]} {
    %c0 = arith.constant 0 : index
    %c0_0 = arith.constant 0 : index
    %0 = vector.load %arg3[%c0, %c0_0] : memref<32x16xbf16, #tpu.memory_space<vmem>>, vector<32x16xbf16>
    %c0_1 = arith.constant 0 : index
    %c0_2 = arith.constant 0 : index
    %c0_3 = arith.constant 0 : index
    %1 = vector.load %arg2[%c0_1, %c0_2, %c0_3] : memref<1x16x384xbf16, #tpu.memory_space<vmem>>, vector<1x16x384xbf16>
    %2 = vector.shape_cast %1 : vector<1x16x384xbf16> to vector<16x384xbf16>
    %cst = arith.constant dense<0.000000e+00> : vector<32x384xf32>
    %3 = tpu.matmul %0, %2, %cst {dimension_numbers = #tpu.dot_dimension_numbers<[1], [0], [0], [1], [0, 0, 1, 1], [], []>} : vector<32x16xbf16>, vector<16x384xbf16>, vector<32x384xf32> -> vector<32x384xf32>
    %c0_4 = arith.constant 0 : index
    %c0_5 = arith.constant 0 : index
    %4 = vector.load %arg4[%c0_4, %c0_5] : memref<32x1xf32, #tpu.memory_space<vmem>>, vector<32x1xf32>
    %5 = vector.broadcast %4 : vector<32x1xf32> to vector<32x384xf32>
    %6 = arith.addf %3, %5 : vector<32x384xf32>
    %c0_6 = arith.constant 0 : index
    %7 = memref.load %arg5[%c0_6] : memref<1xf32, #tpu.memory_space<smem>>
    %cst_7 = arith.constant 0.000000e+00 : f32
    %8 = vector.broadcast %cst_7 : f32 to vector<32x384xf32>
    %9 = arith.cmpf oge, %6, %8 : vector<32x384xf32>
    %10 = vector.broadcast %7 : f32 to vector<32x384xf32>
    %11 = arith.mulf %10, %6 : vector<32x384xf32>
    %12 = arith.select %9, %6, %11 : vector<32x384xi1>, vector<32x384xf32>
    %c0_8 = arith.constant 0 : index
    %c0_9 = arith.constant 0 : index
    %c0_10 = arith.constant 0 : index
    %13 = vector.load %arg6[%c0_8, %c0_9, %c0_10] : memref<1x32x384xf32, #tpu.memory_space<vmem>>, vector<1x32x384xf32>
    %14 = vector.shape_cast %13 : vector<1x32x384xf32> to vector<32x384xf32>
    %15 = vector.shape_cast %12 : vector<32x384xf32> to vector<1x32x384xf32>
    tpu.vector_store %arg6[%c0_8, %c0_9, %c0_10], %15 {strides = array<i32>} : memref<1x32x384xf32, #tpu.memory_space<vmem>>, vector<1x32x384xf32>,
    return
  }
  func.func @transform_0(%arg0: i32, %arg1: i32) -> (i32, i32, i32) {
    %c0_i32 = arith.constant 0 : i32
    %c0_i32_0 = arith.constant 0 : i32
    return %arg0, %c0_i32, %arg1 : i32, i32, i32
  }
  func.func @transform_1(%arg0: i32, %arg1: i32) -> (i32, i32) {
    %c0_i32 = arith.constant 0 : i32
    %c0_i32_0 = arith.constant 0 : i32
    %c0_i32_1 = arith.constant 0 : i32
    return %c0_i32, %c0_i32_0 : i32, i32
  }
  func.func @transform_2(%arg0: i32, %arg1: i32) -> (i32, i32) {
    %c0_i32 = arith.constant 0 : i32
    %c0_i32_0 = arith.constant 0 : i32
    %c0_i32_1 = arith.constant 0 : i32
    return %c0_i32, %c0_i32_0 : i32, i32
  }
  func.func @transform_3(%arg0: i32, %arg1: i32) -> i32 {
    %c0_i32 = arith.constant 0 : i32
    %c0_i32_0 = arith.constant 0 : i32
    return %c0_i32 : i32
  }
  func.func @transform_4(%arg0: i32, %arg1: i32) -> (i32, i32, i32) {
    %c0_i32 = arith.constant 0 : i32
    %c0_i32_0 = arith.constant 0 : i32
    return %arg0, %c0_i32, %arg1 : i32, i32, i32
  }
}

</mosaic_0001>

<llo_original>
// kernel: tile.8
$region0: #{tile.8}
  #allocation0 [shape = 's32[1]{0}', space=sflag, size = 0x4, scoped, tag = 'scoped memory for tile.8']
  %s0 = inlined_call_operand.vmem [shape: f32[8], index: 0, kind: input, shape index: {}]
  %s1 = inlined_call_operand.vmem [shape: f32[4,8], index: 1, kind: output, shape index: {}]
  // Predicated region
  $region2: #{tile.8} parent=0 // pred_check
    _
  $region3: #{tile.8} parent=0 // pred_check_branch
    %3 = sbr.rel (0) target = $region5
  $region4: #{tile.8} parent=0 // pred_region
    _
  $region5: #{tile.8} parent=0 // pred_fallthru
    _
  %v4 = vld [vmem:[%s0] ss:$0 sm:$0xff]
  %5 = vst [vmem:[%s1] sm:$0xf] %v4

// kernel: tile.0
$region0: #{tile.0}
  %s0 = inlined_call_operand.vmem [shape: f32[4,8], index: 0, kind: input, shape index: {}]
  %s1 = inlined_call_operand.vmem [shape: f32[32,1], index: 1, kind: output, shape index: {}]
  $region1: #{tile.0} parent=0
    #allocation0 [shape = 'u8[4096]{0}', space=vmem, size = 0x1000, scoped, tag = 'scoped mem for input reshape']
    %s3 = sshll.u32 1, 4
    %s4 = ssub.s32 %s3, 1
    %v5 = vld [vmem:[%s0] sm:%s4]
    %6 = vst [vmem:[#allocation0] sm:%s4] %v5
    %v7 = vld [vmem:[#allocation0] sm:$0xf]
    %vm8 = vcmask 7168
    %9 = vst.msk [vmem:[%s1] ss:$8 sm:$0xf] %vm8, %v7
    %v10 = vld [vmem:[#allocation0] sm:$0xf]
    %11 = vrot.lane.b32.xlu0 %v10, 127
    %v12 = vpop.permute.xlu0 %11
    %vm13 = vcmask 7168
    %s14 = scalar_lea.vmem %s1, 1
    %15 = vst.msk [vmem:[%s14] ss:$8 sm:$0xf] %vm13, %v12
    %v16 = vld [vmem:[#allocation0] sm:$0xf]
    %17 = vrot.lane.b32.xlu0 %v16, 126
    %v18 = vpop.permute.xlu0 %17
    %vm19 = vcmask 7168
    %s20 = scalar_lea.vmem %s1, 2
    %21 = vst.msk [vmem:[%s20] ss:$8 sm:$0xf] %vm19, %v18
    %v22 = vld [vmem:[#allocation0] sm:$0xf]
    %23 = vrot.lane.b32.xlu0 %v22, 125
    %v24 = vpop.permute.xlu0 %23
    %vm25 = vcmask 7168
    %s26 = scalar_lea.vmem %s1, 3
    %27 = vst.msk [vmem:[%s26] ss:$8 sm:$0xf] %vm25, %v24
    %v28 = vld [vmem:[#allocation0] sm:$0xf]
    %29 = vrot.lane.b32.xlu0 %v28, 124
    %v30 = vpop.permute.xlu0 %29
    %vm31 = vcmask 7168
    %s32 = scalar_lea.vmem %s1, 4
    %33 = vst.msk [vmem:[%s32] ss:$8 sm:$0xf] %vm31, %v30
    %v34 = vld [vmem:[#allocation0] sm:$0xf]
    %35 = vrot.lane.b32.xlu0 %v34, 123
    %v36 = vpop.permute.xlu0 %35
    %vm37 = vcmask 7168
    %s38 = scalar_lea.vmem %s1, 5
    %39 = vst.msk [vmem:[%s38] ss:$8 sm:$0xf] %vm37, %v36
    %v40 = vld [vmem:[#allocation0] sm:$0xf]
    %41 = vrot.lane.b32.xlu0 %v40, 122
    %v42 = vpop.permute.xlu0 %41
    %vm43 = vcmask 7168
    %s44 = scalar_lea.vmem %s1, 6
    %45 = vst.msk [vmem:[%s44] ss:$8 sm:$0xf] %vm43, %v42
    %v46 = vld [vmem:[#allocation0] sm:$0xf]
    %47 = vrot.lane.b32.xlu0 %v46, 121
    %v48 = vpop.permute.xlu0 %47
    %vm49 = vcmask 7168
    %s50 = scalar_lea.vmem %s1, 7
    %51 = vst.msk [vmem:[%s50] ss:$8 sm:$0xf] %vm49, %v48

// kernel: deconv_block_forward.1
$region0: #{deconv_block_forward.1}
  #allocation0 [shape = 'u32[]', space=smem, size = 0x4, offset = 0x4, fixed_abs, tag = 'smem constant byte address 0x4 - core index']
  #allocation1 [shape = 'u32[144,128]{1,0:T(1,128)}', space=vmem, size = 0x12000, scoped, tag = 'internal scratch']
  #allocation2 [shape = 'f32[1]{0:T(128)S(6)}', space=smem, size = 0x200, scoped, tag = 'scoped memory for deconv_block_forward.1']
  %s0 = inlined_call_operand.vmem [shape: bf16[2,16,384], index: 0, kind: input, shape index: {}]
  %s1 = inlined_call_operand.vmem [shape: bf16[32,16], index: 1, kind: input, shape index: {}]
  %s2 = inlined_call_operand.vmem [shape: f32[32,1], index: 2, kind: input, shape index: {}]
  %s3 = inlined_call_operand.<no memory space> [shape: f32[1], index: 3, kind: input, shape index: {}]
  %s4 = inlined_call_operand.vmem [shape: f32[2,32,384], index: 4, kind: output, shape index: {}]
  %s5 = sld [smem:[#allocation0]]
  $region49: #{deconv_block_forward.1} parent=0
    _
  %s7 = ssub.s32 1, %s5
  %s8 = scalar_select 0, %s7, %s5
  %9 = sst [smem:[#allocation2]] %s3
  loop: start=0, step=1, limit=4
  $region2: #{deconv_block_forward.1} parent=0 // loop_pre_header
    _
  $region3: #{deconv_block_forward.1} parent=0 // loop_header
    %s11 = sphi 0, %s15
    %p12 = scmp.ge.s32.totalorder %s11, 4
    %s18 = sphi 0, %s30
    %s19 = sphi 0, %s26
    %s20 = sphi 0, %s18
    %s21 = sphi 0, %s19
    %s22 = sphi 0, %s20
    %s23 = sphi 0, %s21
    %s35 = sphi 0, %s37
    %s38 = sphi 0, %s35
    %s39 = sphi 0, %s38
    %s55 = sphi 0, %s39
    %s59 = sphi 0, %s59
    %s61 = sphi 0, %s59
    %s62 = sphi 0, %s61
    %s76 = sphi 0, %s62
    %s80 = sphi 0, %s80
    %s82 = sphi 0, %s80
    %s83 = sphi 0, %s82
    %s97 = sphi 0, %s83
    %s101 = sphi 0, %s101
    %s103 = sphi 0, %s101
    %s104 = sphi 0, %s103
    %s118 = sphi 0, %s104
    %s126 = sphi 0, %s128
    %s129 = sphi 0, %s126
    %s130 = sphi 0, %s129
    %s146 = sphi 0, %s130
  $region4: #{deconv_block_forward.1} parent=0 // loop_header_branch
    %14 = sbr.rel (%p12) target = $region8
  $region5: #{deconv_block_forward.1} parent=0 // loop_body
    %s16 = ssub.s32 %s11, 1
    %s17 = ssub.s32 %s11, 2
    %s24 = sadd.s32 1, %s19
    %p25 = scmp.ge.s32.totalorder %s24, 1
    %s26 = scalar_select %p25, 0, %s24
    %s27 = sadd.s32 1, %s18
    %s28 = scalar_select %p25, %s27, %s18
    %p29 = scmp.ge.s32.totalorder %s28, 2
    %s30 = scalar_select %p29, 0, %s28
    %s31 = ssub.s32 %s18, %s30
    %s32 = ssub.s32 %s19, %s26
    %s33 = sor.u32 %s31, %s32
    %p34 = scmp.eq.s32.totalorder %s33, 0
    %s36 = sadd.s32 %s35, 1
    %s37 = scalar_select %p34, %s35, %s36
    %p40 = pneg %p34
    %p41 = scmp.eq.s32.totalorder %s11, 1
    %p42 = por %p40, %p41
    %p43 = scmp.ne.s32.totalorder %s35, %s38
    %p44 = scmp.eq.s32.totalorder %s11, 0
    %p45 = por %p43, %p44
    %p46 = scmp.ne.s32.totalorder %s35, %s38
    %p47 = scmp.eq.s32.totalorder %s16, 1
    %p48 = por %p46, %p47
    %p49 = scmp.ne.s32.totalorder %s38, %s39
    %p50 = scmp.eq.s32.totalorder %s16, 0
    %p51 = por %p49, %p50
    %p52 = scmp.ne.s32.totalorder %s38, %s39
    %p53 = scmp.eq.s32.totalorder %s17, 1
    %p54 = por %p52, %p53
    %p56 = scmp.ne.s32.totalorder %s39, %s55
    %p57 = scmp.eq.s32.totalorder %s17, 0
    %p58 = por %p56, %p57
    %s60 = sadd.s32 %s59, 1
    %p63 = scmp.eq.s32.totalorder %s11, 1
    %p64 = scmp.ne.s32.totalorder %s59, %s61
    %p65 = scmp.eq.s32.totalorder %s11, 0
    %p66 = por %p64, %p65
    %p67 = scmp.ne.s32.totalorder %s59, %s61
    %p68 = scmp.eq.s32.totalorder %s16, 1
    %p69 = por %p67, %p68
    %p70 = scmp.ne.s32.totalorder %s61, %s62
    %p71 = scmp.eq.s32.totalorder %s16, 0
    %p72 = por %p70, %p71
    %p73 = scmp.ne.s32.totalorder %s61, %s62
    %p74 = scmp.eq.s32.totalorder %s17, 1
    %p75 = por %p73, %p74
    %p77 = scmp.ne.s32.totalorder %s62, %s76
    %p78 = scmp.eq.s32.totalorder %s17, 0
    %p79 = por %p77, %p78
    %s81 = sadd.s32 %s80, 1
    %p84 = scmp.eq.s32.totalorder %s11, 1
    %p85 = scmp.ne.s32.totalorder %s80, %s82
    %p86 = scmp.eq.s32.totalorder %s11, 0
    %p87 = por %p85, %p86
    %p88 = scmp.ne.s32.totalorder %s80, %s82
    %p89 = scmp.eq.s32.totalorder %s16, 1
    %p90 = por %p88, %p89
    %p91 = scmp.ne.s32.totalorder %s82, %s83
    %p92 = scmp.eq.s32.totalorder %s16, 0
    %p93 = por %p91, %p92
    %p94 = scmp.ne.s32.totalorder %s82, %s83
    %p95 = scmp.eq.s32.totalorder %s17, 1
    %p96 = por %p94, %p95
    %p98 = scmp.ne.s32.totalorder %s83, %s97
    %p99 = scmp.eq.s32.totalorder %s17, 0
    %p100 = por %p98, %p99
    %s102 = sadd.s32 %s101, 1
    %p105 = scmp.eq.s32.totalorder %s11, 1
    %p106 = scmp.ne.s32.totalorder %s101, %s103
    %p107 = scmp.eq.s32.totalorder %s11, 0
    %p108 = por %p106, %p107
    %p109 = scmp.ne.s32.totalorder %s101, %s103
    %p110 = scmp.eq.s32.totalorder %s16, 1
    %p111 = por %p109, %p110
    %p112 = scmp.ne.s32.totalorder %s103, %s104
    %p113 = scmp.eq.s32.totalorder %s16, 0
    %p114 = por %p112, %p113
    %p115 = scmp.ne.s32.totalorder %s103, %s104
    %p116 = scmp.eq.s32.totalorder %s17, 1
    %p117 = por %p115, %p116
    %p119 = scmp.ne.s32.totalorder %s104, %s118
    %p120 = scmp.eq.s32.totalorder %s17, 0
    %p121 = por %p119, %p120
    %s122 = ssub.s32 %s18, %s30
    %s123 = ssub.s32 %s19, %s26
    %s124 = sor.u32 %s122, %s123
    %p125 = scmp.eq.s32.totalorder %s124, 0
    %s127 = sadd.s32 %s126, 1
    %s128 = scalar_select %p125, %s126, %s127
    %p131 = pneg %p125
    %p132 = scmp.eq.s32.totalorder %s11, 1
    %p133 = por %p131, %p132
    %p134 = scmp.ne.s32.totalorder %s126, %s129
    %p135 = scmp.eq.s32.totalorder %s11, 0
    %p136 = por %p134, %p135
    %p137 = scmp.ne.s32.totalorder %s126, %s129
    %p138 = scmp.eq.s32.totalorder %s16, 1
    %p139 = por %p137, %p138
    %p140 = scmp.ne.s32.totalorder %s129, %s130
    %p141 = scmp.eq.s32.totalorder %s16, 0
    %p142 = por %p140, %p141
    %p143 = scmp.ne.s32.totalorder %s129, %s130
    %p144 = scmp.eq.s32.totalorder %s17, 1
    %p145 = por %p143, %p144
    %p147 = scmp.ne.s32.totalorder %s130, %s146
    %p148 = scmp.eq.s32.totalorder %s17, 0
    %p149 = por %p147, %p148
    %p150 = scmp.le.s32.totalorder 1, %s11
    %p151 = scmp.lt.s32.totalorder %s11, 3
    %p152 = pnand %p150, %p151
    %p153 = pneg %p152
    // Predicated region
    $region9: #{deconv_block_forward.1} parent=5 // pred_check
      _
    $region10: #{deconv_block_forward.1} parent=5 // pred_check_branch
      %155 = sbr.rel (%p152) target = $region12
    $region11: #{deconv_block_forward.1} parent=5 // pred_region
      %s156 = ssub.s32 %s11, 1
      // Predicated region
      $region13: #{deconv_block_forward.1} parent=11 // pred_check
        %p157 = pneg %p72
      $region14: #{deconv_block_forward.1} parent=11 // pred_check_branch
        %159 = sbr.rel (%p157) target = $region16
      $region15: #{deconv_block_forward.1} parent=11 // pred_region
        _
      $region16: #{deconv_block_forward.1} parent=11 // pred_fallthru
        _
      // Predicated region
      $region17: #{deconv_block_forward.1} parent=11 // pred_check
        %p160 = pneg %p93
      $region18: #{deconv_block_forward.1} parent=11 // pred_check_branch
        %162 = sbr.rel (%p160) target = $region20
      $region19: #{deconv_block_forward.1} parent=11 // pred_region
        _
      $region20: #{deconv_block_forward.1} parent=11 // pred_fallthru
        _
      // Predicated region
      $region21: #{deconv_block_forward.1} parent=11 // pred_check
        %p163 = pneg %p114
      $region22: #{deconv_block_forward.1} parent=11 // pred_check_branch
        %165 = sbr.rel (%p163) target = $region24
      $region23: #{deconv_block_forward.1} parent=11 // pred_region
        _
      $region24: #{deconv_block_forward.1} parent=11 // pred_fallthru
        _
    $region12: #{deconv_block_forward.1} parent=5 // pred_fallthru
      _
    %p166 = scmp.lt.s32.totalorder %s11, 2
    // Predicated region
    $region25: #{deconv_block_forward.1} parent=5 // pred_check
      %p167 = pneg %p166
    $region26: #{deconv_block_forward.1} parent=5 // pred_check_branch
      %169 = sbr.rel (%p167) target = $region28
    $region27: #{deconv_block_forward.1} parent=5 // pred_region
      // Predicated region
      $region29: #{deconv_block_forward.1} parent=27 // pred_check
        %p170 = pneg %p45
      $region30: #{deconv_block_forward.1} parent=27 // pred_check_branch
        %172 = sbr.rel (%p170) target = $region32
      $region31: #{deconv_block_forward.1} parent=27 // pred_region
        %s173 = smul.u32 3, %s19
        %p174 = scmp.lt.s32.totalorder %s18, 1
        %s175 = scalar_select %p174, %s18, 1
        %p176 = scmp.lt.s32.totalorder %s173, 2
        %s177 = scalar_select %p176, %s173, 2
        %s178 = smul.addr %s175, 6
        %s179 = sadd.s32 %s177, %s178
        %s180 = smul.addr %s179, 4
        %s181 = scalar_lea.vmem %s0, %s180
        %s182 = smul.u32 3, %s19
      $region32: #{deconv_block_forward.1} parent=27 // pred_fallthru
        _
    $region28: #{deconv_block_forward.1} parent=5 // pred_fallthru
      _
    %p183 = scmp.le.s32.totalorder 1, %s11
    %p184 = scmp.lt.s32.totalorder %s11, 3
    %p185 = pnand %p183, %p184
    %p186 = pneg %p185
    // Predicated region
    $region33: #{deconv_block_forward.1} parent=5 // pred_check
      _
    $region34: #{deconv_block_forward.1} parent=5 // pred_check_branch
      %188 = sbr.rel (%p185) target = $region36
    $region35: #{deconv_block_forward.1} parent=5 // pred_region
      %s189 = ssub.s32 %s11, 1
      %s190 = smul.u32 3, %s21
      %p191 = scmp.lt.s32.totalorder %s20, 1
      %s192 = scalar_select %p191, %s20, 1
      %p193 = scmp.lt.s32.totalorder %s190, 2
      %s194 = scalar_select %p193, %s190, 2
      %s195 = smul.addr %s192, 6
      %s196 = sadd.s32 %s194, %s195
      %s197 = smul.addr %s196, 4
      %s198 = scalar_lea.vmem %s0, %s197
      %p199 = pneg %p51
      %p200 = pneg %p48
      %p201 = pneg %p72
      %p202 = pneg %p69
      %p203 = pneg %p93
      %p204 = pneg %p90
      %p205 = pneg %p114
      %p206 = pneg %p111
      %p207 = pneg %p142
      %p208 = pneg %p139
      %s209 = smul.u32 3, %s21
      %p210 = scmp.lt.s32.totalorder %s20, 1
      %s211 = scalar_select %p210, %s20, 1
      %p212 = scmp.lt.s32.totalorder %s209, 2
      %s213 = scalar_select %p212, %s209, 2
      %s214 = smul.addr %s211, 12
      %s215 = sadd.s32 %s213, %s214
      %s216 = smul.addr %s215, 8
      %s217 = scalar_lea.vmem %s4, %s216
      %s218 = smul.u32 3, %s21
      %p219 = scmp.lt.s32.totalorder %s20, 1
      %s220 = scalar_select %p219, %s20, 1
      %p221 = scmp.lt.s32.totalorder %s218, 2
      %s222 = scalar_select %p221, %s218, 2
      %s223 = smul.addr %s220, 6
      %s224 = sadd.s32 %s222, %s223
      %s225 = smul.addr %s224, 4
      %s226 = scalar_lea.vmem %s0, %s225
      %s227 = smul.u32 3, %s21
      %s228 = smul.u32 3, %s21
      %p229 = scmp.lt.s32.totalorder %s20, 1
      %s230 = scalar_select %p229, %s20, 1
      %p231 = scmp.lt.s32.totalorder %s228, 2
      %s232 = scalar_select %p231, %s228, 2
      %s233 = smul.addr %s230, 12
      %s234 = sadd.s32 %s232, %s233
      %s235 = smul.addr %s234, 8
      %s236 = scalar_lea.vmem %s4, %s235
      %s237 = smul.u32 3, %s21
      %v239 = vld [vmem:[%s1] sm:$0xf]
      %v240 = vld [vmem:[%s1 + $0x4] sm:$0xf]
      %v241 = vld [vmem:[%s1 + $0x8] sm:$0xf]
      %v242 = vld [vmem:[%s1 + $0xc] sm:$0xf]
      %v243 = vld [vmem:[%s226] sm:$0xff]
      %v244 = vld [vmem:[%s226 + $0x8] sm:$0xf]
      %v245 = vld [vmem:[%s226 + $0xc] sm:$0xff]
      %v246 = vld [vmem:[%s226 + $0x14] sm:$0xf]
      %v247 = vld [vmem:[%s2] sm:$0xff]
      %v248 = vld [vmem:[%s2 + $0x8] sm:$0xff]
      %v249 = vld [vmem:[%s2 + $0x10] sm:$0xff]
      %v250 = vld [vmem:[%s2 + $0x18] sm:$0xff]
      %252 = vset.pattern.permute.xlu0 0
      %253 = vperm.xlu0 %252, %v247
      %v254 = vpop.permute.xlu0 %253
      %257 = vset.pattern.permute.xlu0 0
      %258 = vperm.xlu0 %257, %v248
      %v259 = vpop.permute.xlu0 %258
      %262 = vset.pattern.permute.xlu0 0
      %263 = vperm.xlu0 %262, %v249
      %v264 = vpop.permute.xlu0 %263
      %267 = vset.pattern.permute.xlu0 0
      %268 = vperm.xlu0 %267, %v250
      %v269 = vpop.permute.xlu0 %268
      %v275 = vunpack.c.l.b16 %v239
      %v276 = vunpack.c.l.b16 %v240
      %v277 = vunpack.c.l.b16 %v241
      %v278 = vunpack.c.l.b16 %v242
      %v279 = vpack.c.b16 %v276, %v275
      %v280 = vpack.c.b16 %v278, %v277
      %v285 = vunpack.c.l.b16 %v243
      %v286 = vunpack.c.h.b16 %v243
      %v287 = vunpack.c.l.b16 %v244
      %v288 = vunpack.c.l.b16 %v245
      %v289 = vunpack.c.h.b16 %v245
      %v290 = vunpack.c.l.b16 %v246
      %v291 = vpack.c.b16 %v288, %v285
      %v292 = vpack.c.b16 %v289, %v286
      %v293 = vpack.c.b16 %v290, %v287
      %vm297 = vcmask 130048
      %v299 = vsel %vm297, %v279, 0
      %v302 = vsel %vm297, %v280, 0
      %304 = vmatprep.subr.bf16.mxu0 0
      %305 = vmatpush1.bf16.msra.mxu0 0
      %306 = vmatprep.subr.bf16.mxu0 0
      %307 = vmatpush1.bf16.msra.mxu0 0
      %308 = vmatprep.subr.bf16.mxu0 0
      %309 = vmatpush1.bf16.msra.mxu0 0
      %310 = vmatprep.subr.bf16.mxu0 0
      %311 = vmatpush1.bf16.msra.mxu0 0
      %312 = vmatprep.subr.bf16.mxu0 0
      %313 = vmatpush1.bf16.msra.mxu0 0
      %314 = vmatprep.subr.bf16.mxu0 0
      %315 = vmatpush1.bf16.msra.mxu0 0
      %316 = vmatprep.subr.bf16.mxu0 0
      %317 = vmatpush1.bf16.msra.mxu0 0
      %318 = vmatprep.subr.bf16.mxu0 %v292
      %319 = vmatpush1.bf16.msra.mxu0 %v291
      %320 = vmatprep.subr.bf16.mxu0 0
      %321 = vmatpush2.bf16.msra.mxu0 0
      %322 = vmatprep.subr.bf16.mxu0 0
      %323 = vmatpush2.bf16.msra.mxu0 0
      %324 = vmatprep.subr.bf16.mxu0 0
      %325 = vmatpush2.bf16.msra.mxu0 0
      %326 = vmatprep.subr.bf16.mxu0 0
      %327 = vmatpush2.bf16.msra.mxu0 0
      %328 = vmatprep.subr.bf16.mxu0 0
      %329 = vmatpush2.bf16.msra.mxu0 0
      %330 = vmatprep.subr.bf16.mxu0 0
      %331 = vmatpush2.bf16.msra.mxu0 0
      %332 = vmatprep.subr.bf16.mxu0 0
      %333 = vmatpush2.bf16.msra.mxu0 0
      %334 = vmatprep.subr.bf16.mxu0 0
      %335 = vmatpush2.bf16.msra.mxu0 0
      %336 = vmatprep.mubr.bf16.mxu0 0
      %337 = vmatmul.mubr.bf16.gmra.mxu0 %v299
      %v338 = vpop.f32.mrf.mxu0
      %v339 = vadd.f32 %v254, %v338
      %v340 = vpop.f32.mrf.mxu0
      %v341 = vadd.f32 %v254, %v340
      %v342 = vpop.f32.mrf.mxu0
      %v343 = vadd.f32 %v259, %v342
      %v344 = vpop.f32.mrf.mxu0
      %v345 = vadd.f32 %v259, %v344
      %346 = vmatprep.mubr.bf16.mxu0 0
      %347 = vmatmul.mubr.bf16.gmra.mxu0 %v302
      %v348 = vpop.f32.mrf.mxu0
      %v349 = vadd.f32 %v264, %v348
      %v350 = vpop.f32.mrf.mxu0
      %v351 = vadd.f32 %v264, %v350
      %v352 = vpop.f32.mrf.mxu0
      %v353 = vadd.f32 %v269, %v352
      %v354 = vpop.f32.mrf.mxu0
      %v355 = vadd.f32 %v269, %v354
      %356 = vdwg.mxu0
      %357 = vmatprep.subr.bf16.mxu0 0
      %358 = vmatpush1.bf16.msra.mxu0 0
      %359 = vmatprep.subr.bf16.mxu0 0
      %360 = vmatpush1.bf16.msra.mxu0 0
      %361 = vmatprep.subr.bf16.mxu0 0
      %362 = vmatpush1.bf16.msra.mxu0 0
      %363 = vmatprep.subr.bf16.mxu0 0
      %364 = vmatpush1.bf16.msra.mxu0 0
      %365 = vmatprep.subr.bf16.mxu0 0
      %366 = vmatpush1.bf16.msra.mxu0 0
      %367 = vmatprep.subr.bf16.mxu0 0
      %368 = vmatpush1.bf16.msra.mxu0 0
      %369 = vmatprep.subr.bf16.mxu0 0
      %370 = vmatpush1.bf16.msra.mxu0 0
      %371 = vmatprep.subr.bf16.mxu0 0
      %372 = vmatpush1.bf16.msra.mxu0 %v293
      %373 = vmatprep.subr.bf16.mxu0 0
      %374 = vmatpush2.bf16.msra.mxu0 0
      %375 = vmatprep.subr.bf16.mxu0 0
      %376 = vmatpush2.bf16.msra.mxu0 0
      %377 = vmatprep.subr.bf16.mxu0 0
      %378 = vmatpush2.bf16.msra.mxu0 0
      %379 = vmatprep.subr.bf16.mxu0 0
      %380 = vmatpush2.bf16.msra.mxu0 0
      %381 = vmatprep.subr.bf16.mxu0 0
      %382 = vmatpush2.bf16.msra.mxu0 0
      %383 = vmatprep.subr.bf16.mxu0 0
      %384 = vmatpush2.bf16.msra.mxu0 0
      %385 = vmatprep.subr.bf16.mxu0 0
      %386 = vmatpush2.bf16.msra.mxu0 0
      %387 = vmatprep.subr.bf16.mxu0 0
      %388 = vmatpush2.bf16.msra.mxu0 0
      %389 = vmatprep.mubr.bf16.mxu0 0
      %390 = vmatmul.mubr.bf16.gmra.mxu0 %v299
      %v391 = vpop.f32.mrf.mxu0
      %v392 = vadd.f32 %v254, %v391
      %v393 = vpop.f32.mrf.mxu0
      %v394 = vpop.f32.mrf.mxu0
      %v395 = vadd.f32 %v259, %v394
      %v396 = vpop.f32.mrf.mxu0
      %397 = vmatprep.mubr.bf16.mxu0 0
      %398 = vmatmul.mubr.bf16.gmra.mxu0 %v302
      %v399 = vpop.f32.mrf.mxu0
      %v400 = vadd.f32 %v264, %v399
      %v401 = vpop.f32.mrf.mxu0
      %v402 = vpop.f32.mrf.mxu0
      %v403 = vadd.f32 %v269, %v402
      %v404 = vpop.f32.mrf.mxu0
      %405 = vdwg.mxu0
      %s406 = sld [smem:[#allocation2]]
      %vm407 = vcmp.ge.f32.partialorder %v339, 0.0
      %vm408 = vcmp.ge.f32.partialorder %v341, 0.0
      %vm409 = vcmp.ge.f32.partialorder %v392, 0.0
      %vm410 = vcmp.ge.f32.partialorder %v343, 0.0
      %vm411 = vcmp.ge.f32.partialorder %v345, 0.0
      %vm412 = vcmp.ge.f32.partialorder %v395, 0.0
      %vm413 = vcmp.ge.f32.partialorder %v349, 0.0
      %vm414 = vcmp.ge.f32.partialorder %v351, 0.0
      %vm415 = vcmp.ge.f32.partialorder %v400, 0.0
      %vm416 = vcmp.ge.f32.partialorder %v353, 0.0
      %vm417 = vcmp.ge.f32.partialorder %v355, 0.0
      %vm418 = vcmp.ge.f32.partialorder %v403, 0.0
      %v419 = vstv %s406
      %v420 = vmul.f32 %v419, %v339
      %v421 = vmul.f32 %v419, %v341
      %v422 = vmul.f32 %v419, %v392
      %v423 = vmul.f32 %v419, %v343
      %v424 = vmul.f32 %v419, %v345
      %v425 = vmul.f32 %v419, %v395
      %v426 = vmul.f32 %v419, %v349
      %v427 = vmul.f32 %v419, %v351
      %v428 = vmul.f32 %v419, %v400
      %v429 = vmul.f32 %v419, %v353
      %v430 = vmul.f32 %v419, %v355
      %v431 = vmul.f32 %v419, %v403
      %v432 = vsel %vm407, %v339, %v420
      %v433 = vsel %vm408, %v341, %v421
      %v434 = vsel %vm409, %v392, %v422
      %v435 = vsel %vm410, %v343, %v423
      %v436 = vsel %vm411, %v345, %v424
      %v437 = vsel %vm412, %v395, %v425
      %v438 = vsel %vm413, %v349, %v426
      %v439 = vsel %vm414, %v351, %v427
      %v440 = vsel %vm415, %v400, %v428
      %v441 = vsel %vm416, %v353, %v429
      %v442 = vsel %vm417, %v355, %v430
      %v443 = vsel %vm418, %v403, %v431
      %444 = vst [vmem:[%s236] sm:$0xff] %v432
      %445 = vst [vmem:[%s236 + $0x8] sm:$0xff] %v433
      %446 = vst [vmem:[%s236 + $0x10] sm:$0xff] %v434
      %447 = vst [vmem:[%s236 + $0x18] sm:$0xff] %v435
      %448 = vst [vmem:[%s236 + $0x20] sm:$0xff] %v436
      %449 = vst [vmem:[%s236 + $0x28] sm:$0xff] %v437
      %450 = vst [vmem:[%s236 + $0x30] sm:$0xff] %v438
      %451 = vst [vmem:[%s236 + $0x38] sm:$0xff] %v439
      %452 = vst [vmem:[%s236 + $0x40] sm:$0xff] %v440
      %453 = vst [vmem:[%s236 + $0x48] sm:$0xff] %v441
      %454 = vst [vmem:[%s236 + $0x50] sm:$0xff] %v442
      %455 = vst [vmem:[%s236 + $0x58] sm:$0xff] %v443
      %s456 = smul.u32 3, %s21
      %p457 = scmp.lt.s32.totalorder %s20, 1
      %s458 = scalar_select %p457, %s20, 1
      %p459 = scmp.lt.s32.totalorder %s456, 2
      %s460 = scalar_select %p459, %s456, 2
      %s461 = smul.addr %s458, 12
      %s462 = sadd.s32 %s460, %s461
      %s463 = smul.addr %s462, 8
      %s464 = scalar_lea.vmem %s4, %s463
      // Predicated region
      $region37: #{deconv_block_forward.1} parent=35 // pred_check
        %p465 = pneg %p139
      $region38: #{deconv_block_forward.1} parent=35 // pred_check_branch
        %467 = sbr.rel (%p465) target = $region40
      $region39: #{deconv_block_forward.1} parent=35 // pred_region
        %s468 = smul.u32 3, %s21
      $region40: #{deconv_block_forward.1} parent=35 // pred_fallthru
        _
    $region36: #{deconv_block_forward.1} parent=5 // pred_fallthru
      _
    %p469 = scmp.le.s32.totalorder 2, %s11
    // Predicated region
    $region41: #{deconv_block_forward.1} parent=5 // pred_check
      %p470 = pneg %p469
    $region42: #{deconv_block_forward.1} parent=5 // pred_check_branch
      %472 = sbr.rel (%p470) target = $region44
    $region43: #{deconv_block_forward.1} parent=5 // pred_region
      %s473 = ssub.s32 %s11, 2
      // Predicated region
      $region45: #{deconv_block_forward.1} parent=43 // pred_check
        %p474 = pneg %p145
      $region46: #{deconv_block_forward.1} parent=43 // pred_check_branch
        %476 = sbr.rel (%p474) target = $region48
      $region47: #{deconv_block_forward.1} parent=43 // pred_region
        %s477 = smul.u32 3, %s23
        %p478 = scmp.lt.s32.totalorder %s22, 1
        %s479 = scalar_select %p478, %s22, 1
        %p480 = scmp.lt.s32.totalorder %s477, 2
        %s481 = scalar_select %p480, %s477, 2
        %s482 = smul.addr %s479, 12
        %s483 = sadd.s32 %s481, %s482
        %s484 = smul.addr %s483, 8
        %s485 = scalar_lea.vmem %s4, %s484
      $region48: #{deconv_block_forward.1} parent=43 // pred_fallthru
        _
    $region44: #{deconv_block_forward.1} parent=5 // pred_fallthru
      _
  $region6: #{deconv_block_forward.1} parent=0 // loop_footer
    %s15 = sadd.s32 1, %s11
  $region7: #{deconv_block_forward.1} parent=0 // loop_footer_branch
    %10 = sbr.rel target = $region3
  $region8: #{deconv_block_forward.1} parent=0 // loop_exit
    _

</llo_original>
